<compile_context>
chip_gen: v5e
topology: v5e:2x2
jax: 0.10.0
libtpu: 0.0.40
codegen_flags: <defaults>
</compile_context>

<pallas_src>
import functools
import math

import jax
import jax.numpy as jnp
from jax import lax
from jax.experimental import pallas as pl
from jax.experimental.pallas import tpu as pltpu


def _round_up(v, m):
    return (v + m - 1) // m * m


def _row_chunk_for(tm):
    # Largest row sub-chunk (<= 256, multiple of 8) that divides the tile.
    if tm % 256 == 0:
        return 256
    if tm % 128 == 0:
        return 128
    return tm


def _vmem_capacity_bytes():
    try:
        return int(pltpu.get_tpu_info().vmem_capacity_bytes)
    except Exception:
        return 64 * 1024 * 1024  # conservative: v7x per-TC VMEM


def _lora_kernel(x_ref, w1t_ref, w2t_ref, o_ref, *, row_chunk, n_chunks,
                 compute_dtype):
    # x_ref:   (tm, in_features)   native dtype (e.g. f32), cast per-chunk
    # w1t_ref: (in_features, rank) compute dtype (bf16) -> MXU bf16 matmul
    # w2t_ref: (rank, out_p)       f32 (tiny K; keeps accuracy, no h downcast)
    # o_ref:   (tm, out_p)
    w1t = w1t_ref[...]
    w2t = w2t_ref[...]

    def do_chunk(r0):
        xt = x_ref[pl.ds(r0, row_chunk), :].astype(compute_dtype)
        # h = x @ W1^T  -> (row_chunk, rank), f32 accumulation on the MXU.
        h = lax.dot_general(
            xt, w1t,
            dimension_numbers=(((1,), (0,)), ((), ())),
            preferred_element_type=jnp.float32,
        )
        # y = h @ W2^T  -> (row_chunk, out_p); K = rank is tiny, stay in f32.
        y = lax.dot_general(
            h, w2t,
            dimension_numbers=(((1,), (0,)), ((), ())),
            preferred_element_type=jnp.float32,
        )
        o_ref[pl.ds(r0, row_chunk), :] = y.astype(o_ref.dtype)

    if n_chunks == 1:
        do_chunk(0)
    else:
        def body(c, carry):
            do_chunk(pl.multiple_of(c * row_chunk, 8))
            return carry
        lax.fori_loop(0, n_chunks, body, 0, unroll=True)


def lora_adapter(x, w1, w2, *, tm=None, compute_dtype=jnp.bfloat16,
                 out_dtype=None):
    """x: (..., in_features); w1: (rank, in_features); w2: (out_features, rank).

    out_dtype defaults to x.dtype (module semantics); pass jnp.bfloat16 to halve
    output write traffic when downstream tolerates it.
    """
    in_features = x.shape[-1]
    rank = w1.shape[0]
    out_features = w2.shape[0]
    if out_dtype is None:
        out_dtype = x.dtype

    lead_shape = x.shape[:-1]
    m = math.prod(lead_shape) if lead_shape else 1

    # x stays in its native dtype (the bf16 cast happens in-kernel, per tile).
    x2d = x.reshape(m, in_features)

    # One-time tiny weight prep: pre-transpose so both contractions are plain
    # (rows, K) x (K, cols) -- no per-grid-step in-kernel transposes.
    out_p = _round_up(out_features, 128)
    w1t = w1.T.astype(compute_dtype)            # (in_features, rank), bf16
    w2t = w2.T.astype(jnp.float32)              # (rank, out_features), f32
    if out_p != out_features:
        w2t = jnp.pad(w2t, ((0, 0), (0, out_p - out_features)))

    xbytes = x2d.dtype.itemsize
    obytes = jnp.dtype(out_dtype).itemsize
    cbytes = jnp.dtype(compute_dtype).itemsize
    sub = 16 if xbytes == 2 else 8              # sublane packing of x tiles

    # Per-chip VMEM budget: tight on v7x (64 MiB/TC), roomier on v5e/v6e.
    vmem_cap = _vmem_capacity_bytes()
    if vmem_cap >= 100 * 1024 * 1024:           # v5e / v6e (128 MiB)
        vmem_budget = 64 * 1024 * 1024
        vmem_limit = 96 * 1024 * 1024
        tm_default = 1024
    else:                                       # v7x (64 MiB per TC)
        vmem_budget = 30 * 1024 * 1024
        vmem_limit = 40 * 1024 * 1024
        tm_default = 512
    if tm is None:
        tm = tm_default

    tm_eff = min(tm, _round_up(m, sub))
    tm_eff = max(sub, _round_up(tm_eff, sub))

    def footprint(t):
        rc = _row_chunk_for(t)
        tiles = 2 * t * (in_features * xbytes + out_p * obytes)        # pipelined x/out
        weights = 2 * (in_features * rank * cbytes + rank * out_p * 4)  # resident (dbl-buf)
        scratch = rc * (in_features * cbytes + rank * 4 + out_p * 4)    # bf16 x chunk, f32 h, f32 y
        return tiles + weights + scratch

    while tm_eff > sub and footprint(tm_eff) > vmem_budget:
        tm_eff = max(sub, _round_up(tm_eff // 2, sub))

    # v7x: make sure the "parallel" M axis has >= 2 grid steps so both
    # TensorCores get work (harmless on single-TC v5e/v6e).
    if m > sub and pl.cdiv(m, tm_eff) < 2:
        tm_eff = max(sub, _round_up(pl.cdiv(m, 2), sub))

    grid = (pl.cdiv(m, tm_eff),)                # ragged last block is masked; no row-pad copy
    row_chunk = _row_chunk_for(tm_eff)
    n_chunks = tm_eff // row_chunk

    kernel = functools.partial(
        _lora_kernel,
        row_chunk=row_chunk,
        n_chunks=n_chunks,
        compute_dtype=compute_dtype,
    )

    out = pl.pallas_call(
        kernel,
        out_shape=jax.ShapeDtypeStruct((m, out_p), out_dtype),
        grid_spec=pl.GridSpec(
            grid=grid,
            in_specs=[
                pl.BlockSpec((tm_eff, in_features), lambda i: (i, 0)),
                pl.BlockSpec((in_features, rank), lambda i: (0, 0)),
                pl.BlockSpec((rank, out_p), lambda i: (0, 0)),
            ],
            out_specs=pl.BlockSpec((tm_eff, out_p), lambda i: (i, 0)),
        ),
        compiler_params=pltpu.CompilerParams(
            dimension_semantics=("parallel",),
            vmem_limit_bytes=vmem_limit,
        ),
    )(x2d, w1t, w2t)

    if out_p != out_features:
        out = out[:, :out_features]
    return out.reshape(*lead_shape, out_features)


def lora_reference(x, w1, w2):
    # Pure-JAX reference matching nn.Sequential(Linear, Linear), both bias-free.
    return (x @ w1.T) @ w2.T


if __name__ == "__main__":
    # Small shapes consistent with the module: LoRA over a hidden dim.
    batch, seq, in_features, out_features, rank = 2, 8, 32, 32, 4

    key = jax.random.PRNGKey(0)
    kx, kw1, kw2 = jax.random.split(key, 3)

    x = jax.random.normal(kx, (batch, seq, in_features), dtype=jnp.float32)
    # Deterministic synthetic weights (shapes match nn.Linear weights).
    w1 = jax.random.normal(kw1, (rank, in_features), dtype=jnp.float32) * 0.1
    w2 = jax.random.normal(kw2, (out_features, rank), dtype=jnp.float32) * 0.1

    y = lora_adapter(x, w1, w2)
    y = jax.block_until_ready(y)

    y_ref = lora_reference(x, w1, w2)
    assert y.shape == (batch, seq, out_features)
    # First matmul in bf16 (f32 accumulation), second matmul in f32.
    assert jnp.allclose(y, y_ref, atol=2e-2, rtol=2e-2), "mismatch vs reference"

    print("KERNEL_OK")
</pallas_src>

<mosaic_0001>
module attributes {stable_mosaic.version = 11 : i64} {
  func.func @_lora_kernel(%arg0: i32, %arg1: memref<8x32xf32, #tpu.memory_space<vmem>>, %arg2: memref<32x4xbf16, #tpu.memory_space<vmem>>, %arg3: memref<4x128xf32, #tpu.memory_space<vmem>>, %arg4: memref<8x128xf32, #tpu.memory_space<vmem>>) attributes {dimension_semantics = [#tpu.dimension_semantics<parallel>], iteration_bounds = array<i64: 2>, scalar_prefetch = 0 : i64, scratch_operands = 0 : i64, tpu.core_type = #tpu.core_type<tc>, window_params = [{transform_indices = @transform_0, window_bounds = array<i64: 8, 32>}, {pipeline_mode = #tpu.pipeline_mode<synchronous>, transform_indices = @transform_1, window_bounds = array<i64: 32, 4>}, {pipeline_mode = #tpu.pipeline_mode<synchronous>, transform_indices = @transform_2, window_bounds = array<i64: 4, 128>}, {transform_indices = @transform_3, window_bounds = array<i64: 8, 128>}]} {
    %c0 = arith.constant 0 : index
    %c0_0 = arith.constant 0 : index
    %0 = vector.load %arg2[%c0, %c0_0] : memref<32x4xbf16, #tpu.memory_space<vmem>>, vector<32x4xbf16>
    %c0_1 = arith.constant 0 : index
    %c0_2 = arith.constant 0 : index
    %1 = vector.load %arg3[%c0_1, %c0_2] : memref<4x128xf32, #tpu.memory_space<vmem>>, vector<4x128xf32>
    %c0_3 = arith.constant 0 : index
    %c0_4 = arith.constant 0 : index
    %2 = vector.load %arg1[%c0_3, %c0_4] : memref<8x32xf32, #tpu.memory_space<vmem>>, vector<8x32xf32>
    %3 = arith.truncf %2 : vector<8x32xf32> to vector<8x32xbf16>
    %cst = arith.constant dense<0.000000e+00> : vector<8x4xf32>
    %4 = tpu.matmul %3, %0, %cst {dimension_numbers = #tpu.dot_dimension_numbers<[1], [0], [0], [1], [0, 0, 1, 1], [], []>} : vector<8x32xbf16>, vector<32x4xbf16>, vector<8x4xf32> -> vector<8x4xf32>
    %cst_5 = arith.constant dense<0.000000e+00> : vector<8x128xf32>
    %5 = tpu.matmul %4, %1, %cst_5 {dimension_numbers = #tpu.dot_dimension_numbers<[1], [0], [0], [1], [0, 0, 1, 1], [], []>} : vector<8x4xf32>, vector<4x128xf32>, vector<8x128xf32> -> vector<8x128xf32>
    %c0_6 = arith.constant 0 : index
    %c0_7 = arith.constant 0 : index
    %6 = vector.load %arg4[%c0_6, %c0_7] : memref<8x128xf32, #tpu.memory_space<vmem>>, vector<8x128xf32>
    tpu.vector_store %arg4[%c0_6, %c0_7], %5 {strides = array<i32>} : memref<8x128xf32, #tpu.memory_space<vmem>>, vector<8x128xf32>,
    return
  }
  func.func @transform_0(%arg0: i32) -> (i32, i32) {
    %c0_i32 = arith.constant 0 : i32
    %c0_i32_0 = arith.constant 0 : i32
    return %arg0, %c0_i32 : i32, i32
  }
  func.func @transform_1(%arg0: i32) -> (i32, i32) {
    %c0_i32 = arith.constant 0 : i32
    %c0_i32_0 = arith.constant 0 : i32
    %c0_i32_1 = arith.constant 0 : i32
    return %c0_i32, %c0_i32_0 : i32, i32
  }
  func.func @transform_2(%arg0: i32) -> (i32, i32) {
    %c0_i32 = arith.constant 0 : i32
    %c0_i32_0 = arith.constant 0 : i32
    %c0_i32_1 = arith.constant 0 : i32
    return %c0_i32, %c0_i32_0 : i32, i32
  }
  func.func @transform_3(%arg0: i32) -> (i32, i32) {
    %c0_i32 = arith.constant 0 : i32
    %c0_i32_0 = arith.constant 0 : i32
    return %arg0, %c0_i32 : i32, i32
  }
}

</mosaic_0001>

<llo_original>
// kernel: tpu_custom_call.1
$region0: #{tpu_custom_call.1}
  #allocation0 [shape = 'u32[]', space=smem, size = 0x4, offset = 0x4, fixed_abs, tag = 'smem constant byte address 0x4 - core index']
  #allocation1 [shape = 'u32[72,128]{1,0:T(1,128)}', space=vmem, size = 0x9000, scoped, tag = 'internal scratch']
  %s0 = inlined_call_operand.vmem [shape: f32[16,32], index: 0, kind: input, shape index: {}]
  %s1 = inlined_call_operand.vmem [shape: bf16[32,4], index: 1, kind: input, shape index: {}]
  %s2 = inlined_call_operand.hbm [shape: f32[4,128], index: 2, kind: input, shape index: {}]
  %s3 = inlined_call_operand.hbm [shape: f32[16,128], index: 3, kind: output, shape index: {}]
  %s4 = sld [smem:[#allocation0]]
  $region49: #{tpu_custom_call.1} parent=0
    _
  %s6 = ssub.s32 1, %s4
  %s7 = scalar_select 0, %s6, %s4
  $region1: #{tpu_custom_call.1} parent=0
    #allocation2 [shape = 'u8[2048]{0}', space=vmem, size = 0x800, scoped, tag = 'input window, operand 2, single buffered']
    #allocation3 [shape = 's32[2]{0}', space=sflag, size = 0x8, scoped, tag = 'scoped memory for tpu_custom_call.1']
    #allocation4 [shape = 's32[2]{0}', space=sflag, size = 0x8, scoped, tag = 'scoped memory for tpu_custom_call.1']
    #allocation5 [shape = 'u8[8192]{0}', space=vmem, size = 0x2000, scoped, tag = 'output window, operand 0']
    %8 = vsyncpa [#allocation3], 0
    %9 = vsyncpa [#allocation4], 0
    %s10 = scalar_lea.sflag [#allocation4], 1
    %11 = vsyncpa %s10, 0
    loop: start=0, step=1, limit=4
    $region2: #{tpu_custom_call.1} parent=1 // loop_pre_header
      _
    $region3: #{tpu_custom_call.1} parent=1 // loop_header
      %s13 = sphi 0, %s17
      %p14 = scmp.ge.s32.totalorder %s13, 4
      %s23 = sphi 0, %s25
      %s26 = sphi 0, %s23
      %s27 = sphi 0, %s26
      %s43 = sphi 0, %s27
      %s47 = sphi 0, %s47
      %s49 = sphi 0, %s47
      %s50 = sphi 0, %s49
      %s64 = sphi 0, %s50
      %s68 = sphi 0, %s68
      %s70 = sphi 0, %s68
      %s71 = sphi 0, %s70
      %s85 = sphi 0, %s71
      %s91 = sphi 0, %s93
      %s94 = sphi 0, %s91
      %s95 = sphi 0, %s94
      %s111 = sphi 0, %s95
    $region4: #{tpu_custom_call.1} parent=1 // loop_header_branch
      %16 = sbr.rel (%p14) target = $region8
    $region5: #{tpu_custom_call.1} parent=1 // loop_body
      %s18 = ssub.s32 %s13, 1
      %s19 = ssub.s32 %s13, 2
      %s20 = sadd.s32 %s13, 1
      %s21 = ssub.s32 %s13, %s20
      %p22 = scmp.eq.s32.totalorder %s21, 0
      %s24 = sadd.s32 %s23, 1
      %s25 = scalar_select %p22, %s23, %s24
      %p28 = pneg %p22
      %p29 = scmp.eq.s32.totalorder %s13, 1
      %p30 = por %p28, %p29
      %p31 = scmp.ne.s32.totalorder %s23, %s26
      %p32 = scmp.eq.s32.totalorder %s13, 0
      %p33 = por %p31, %p32
      %p34 = scmp.ne.s32.totalorder %s23, %s26
      %p35 = scmp.eq.s32.totalorder %s18, 1
      %p36 = por %p34, %p35
      %p37 = scmp.ne.s32.totalorder %s26, %s27
      %p38 = scmp.eq.s32.totalorder %s18, 0
      %p39 = por %p37, %p38
      %p40 = scmp.ne.s32.totalorder %s26, %s27
      %p41 = scmp.eq.s32.totalorder %s19, 1
      %p42 = por %p40, %p41
      %p44 = scmp.ne.s32.totalorder %s27, %s43
      %p45 = scmp.eq.s32.totalorder %s19, 0
      %p46 = por %p44, %p45
      %s48 = sadd.s32 %s47, 1
      %p51 = scmp.eq.s32.totalorder %s13, 1
      %p52 = scmp.ne.s32.totalorder %s47, %s49
      %p53 = scmp.eq.s32.totalorder %s13, 0
      %p54 = por %p52, %p53
      %p55 = scmp.ne.s32.totalorder %s47, %s49
      %p56 = scmp.eq.s32.totalorder %s18, 1
      %p57 = por %p55, %p56
      %p58 = scmp.ne.s32.totalorder %s49, %s50
      %p59 = scmp.eq.s32.totalorder %s18, 0
      %p60 = por %p58, %p59
      %p61 = scmp.ne.s32.totalorder %s49, %s50
      %p62 = scmp.eq.s32.totalorder %s19, 1
      %p63 = por %p61, %p62
      %p65 = scmp.ne.s32.totalorder %s50, %s64
      %p66 = scmp.eq.s32.totalorder %s19, 0
      %p67 = por %p65, %p66
      %s69 = sadd.s32 %s68, 1
      %p72 = scmp.eq.s32.totalorder %s13, 1
      %p73 = scmp.ne.s32.totalorder %s68, %s70
      %p74 = scmp.eq.s32.totalorder %s13, 0
      %p75 = por %p73, %p74
      %p76 = scmp.ne.s32.totalorder %s68, %s70
      %p77 = scmp.eq.s32.totalorder %s18, 1
      %p78 = por %p76, %p77
      %p79 = scmp.ne.s32.totalorder %s70, %s71
      %p80 = scmp.eq.s32.totalorder %s18, 0
      %p81 = por %p79, %p80
      %p82 = scmp.ne.s32.totalorder %s70, %s71
      %p83 = scmp.eq.s32.totalorder %s19, 1
      %p84 = por %p82, %p83
      %p86 = scmp.ne.s32.totalorder %s71, %s85
      %p87 = scmp.eq.s32.totalorder %s19, 0
      %p88 = por %p86, %p87
      %s89 = ssub.s32 %s13, %s20
      %p90 = scmp.eq.s32.totalorder %s89, 0
      %s92 = sadd.s32 %s91, 1
      %s93 = scalar_select %p90, %s91, %s92
      %p96 = pneg %p90
      %p97 = scmp.eq.s32.totalorder %s13, 1
      %p98 = por %p96, %p97
      %p99 = scmp.ne.s32.totalorder %s91, %s94
      %p100 = scmp.eq.s32.totalorder %s13, 0
      %p101 = por %p99, %p100
      %p102 = scmp.ne.s32.totalorder %s91, %s94
      %p103 = scmp.eq.s32.totalorder %s18, 1
      %p104 = por %p102, %p103
      %p105 = scmp.ne.s32.totalorder %s94, %s95
      %p106 = scmp.eq.s32.totalorder %s18, 0
      %p107 = por %p105, %p106
      %p108 = scmp.ne.s32.totalorder %s94, %s95
      %p109 = scmp.eq.s32.totalorder %s19, 1
      %p110 = por %p108, %p109
      %p112 = scmp.ne.s32.totalorder %s95, %s111
      %p113 = scmp.eq.s32.totalorder %s19, 0
      %p114 = por %p112, %p113
      %p115 = scmp.le.s32.totalorder 1, %s13
      %p116 = scmp.lt.s32.totalorder %s13, 3
      %p117 = pnand %p115, %p116
      %p118 = pneg %p117
      // Predicated region
      $region9: #{tpu_custom_call.1} parent=5 // pred_check
        _
      $region10: #{tpu_custom_call.1} parent=5 // pred_check_branch
        %120 = sbr.rel (%p117) target = $region12
      $region11: #{tpu_custom_call.1} parent=5 // pred_region
        %s121 = ssub.s32 %s13, 1
        // Predicated region
        $region13: #{tpu_custom_call.1} parent=11 // pred_check
          %p122 = pneg %p60
        $region14: #{tpu_custom_call.1} parent=11 // pred_check_branch
          %124 = sbr.rel (%p122) target = $region16
        $region15: #{tpu_custom_call.1} parent=11 // pred_region
          _
        $region16: #{tpu_custom_call.1} parent=11 // pred_fallthru
          _
        // Predicated region
        $region17: #{tpu_custom_call.1} parent=11 // pred_check
          %p125 = pneg %p81
        $region18: #{tpu_custom_call.1} parent=11 // pred_check_branch
          %127 = sbr.rel (%p125) target = $region20
        $region19: #{tpu_custom_call.1} parent=11 // pred_region
          %129 = vsyncadd [#allocation3], 0
          %s131 = sshll.u32 %s2, 4
          %s132 = int_to_ptr.hbm [resolvable:$true] %s131
          %s133 = sshll.u32 [#allocation2], 4
          %s134 = int_to_ptr.vmem [resolvable:$true] %s133
          %136 = dma.hbm_to_vmem [thread:$0]  %s132, 64, %s134, [#allocation3]
        $region20: #{tpu_custom_call.1} parent=11 // pred_fallthru
          _
      $region12: #{tpu_custom_call.1} parent=5 // pred_fallthru
        _
      %p137 = scmp.lt.s32.totalorder %s13, 2
      // Predicated region
      $region21: #{tpu_custom_call.1} parent=5 // pred_check
        %p138 = pneg %p137
      $region22: #{tpu_custom_call.1} parent=5 // pred_check_branch
        %140 = sbr.rel (%p138) target = $region24
      $region23: #{tpu_custom_call.1} parent=5 // pred_region
        // Predicated region
        $region25: #{tpu_custom_call.1} parent=23 // pred_check
          %p141 = pneg %p33
        $region26: #{tpu_custom_call.1} parent=23 // pred_check_branch
          %143 = sbr.rel (%p141) target = $region28
        $region27: #{tpu_custom_call.1} parent=23 // pred_region
          %p144 = scmp.lt.s32.totalorder %s13, 1
          %s145 = scalar_select %p144, %s13, 1
          %s146 = smul.addr %s145, 8
          %s147 = scalar_lea.vmem %s0, %s146
        $region28: #{tpu_custom_call.1} parent=23 // pred_fallthru
          _
      $region24: #{tpu_custom_call.1} parent=5 // pred_fallthru
        _
      %p148 = scmp.le.s32.totalorder 1, %s13
      %p149 = scmp.lt.s32.totalorder %s13, 3
      %p150 = pnand %p148, %p149
      %p151 = pneg %p150
      // Predicated region
      $region29: #{tpu_custom_call.1} parent=5 // pred_check
        _
      $region30: #{tpu_custom_call.1} parent=5 // pred_check_branch
        %153 = sbr.rel (%p150) target = $region32
      $region31: #{tpu_custom_call.1} parent=5 // pred_region
        %s154 = ssub.s32 %s13, 1
        // Predicated region
        $region33: #{tpu_custom_call.1} parent=31 // pred_check
          %p155 = pneg %p81
        $region34: #{tpu_custom_call.1} parent=31 // pred_check_branch
          %157 = sbr.rel (%p155) target = $region36
        $region35: #{tpu_custom_call.1} parent=31 // pred_region
          %159 = dma.done [#allocation3], 64
        $region36: #{tpu_custom_call.1} parent=31 // pred_fallthru
          _
        %p160 = scmp.lt.s32.totalorder %s18, 1
        %s161 = scalar_select %p160, %s18, 1
        %s162 = smul.addr %s161, 8
        %s163 = scalar_lea.vmem %s0, %s162
        %p164 = pneg %p39
        %p165 = pneg %p36
        %p166 = pneg %p60
        %p167 = pneg %p57
        %p168 = pneg %p81
        %p169 = pneg %p78
        %p170 = pneg %p107
        %p171 = pneg %p104
        %s172 = sand.u32 %s94, 1
        %s173 = scalar_lea.sflag [#allocation4], %s172
        %s174 = sand.u32 %s94, 1
        %s175 = smul.addr %s174, 8
        %s176 = scalar_lea.vmem [#allocation5], %s175
        %p177 = scmp.lt.s32.totalorder %s18, 1
        %s178 = scalar_select %p177, %s18, 1
        %s179 = smul.addr %s178, 8
        %s180 = scalar_lea.vmem %s0, %s179
        %v182 = vld [vmem:[%s1] sm:$0xf]
        %v183 = vld [vmem:[%s1 + $0x4] sm:$0xf]
        %v184 = vld [vmem:[%s1 + $0x8] sm:$0xf]
        %v185 = vld [vmem:[%s1 + $0xc] sm:$0xf]
        %v186 = vld [vmem:[#allocation2] sm:$0xf]
        %v187 = vld [vmem:[%s180] sm:$0xff]
        %v188 = vpack.c.bf16 %v187, %v187
        %v193 = vunpack.c.l.b16 %v182
        %v194 = vunpack.c.l.b16 %v183
        %v195 = vunpack.c.l.b16 %v184
        %v196 = vunpack.c.l.b16 %v185
        %v197 = vpack.c.b16 %v194, %v193
        %v198 = vpack.c.b16 %v196, %v195
        %vm201 = vcmask 261120
        %v203 = vsel %vm201, %v188, 0
        %205 = vmatpush.bf16.msra.mxu0 0
        %206 = vmatpush.bf16.msra.mxu0 0
        %207 = vmatpush.bf16.msra.mxu0 0
        %208 = vmatpush.bf16.msra.mxu0 0
        %209 = vmatpush.bf16.msra.mxu0 0
        %210 = vmatpush.bf16.msra.mxu0 0
        %211 = vmatpush.bf16.msra.mxu0 %v198
        %212 = vmatpush.bf16.msra.mxu0 %v197
        %213 = vmatmul.bf16.gmra.mxu0 %v203
        %v214 = vpop.f32.mrf.mxu0
        %v215 = vadd.f32 0.0, %v214
        %v216 = vpop.f32.mrf.mxu0
        %217 = vdwg.mxu0
        %vm218 = vcmask 31744
        %v220 = vsel %vm218, %v215, 0
        %vm222 = vcmask 1043456
        %v224 = vsel %vm222, %v186, 0
        %226 = vmatpush.msra.mxu0 0.0
        %227 = vmatpush.msra.mxu0 0.0
        %228 = vmatpush.msra.mxu0 0.0
        %229 = vmatpush.msra.mxu0 0.0
        %230 = vmatpush.msra.mxu0 0.0
        %231 = vmatpush.msra.mxu0 0.0
        %232 = vmatpush.msra.mxu0 0.0
        %233 = vmatpush.msra.mxu0 0.0
        %234 = vmatpush.msra.mxu0 0.0
        %235 = vmatpush.msra.mxu0 0.0
        %236 = vmatpush.msra.mxu0 0.0
        %237 = vmatpush.msra.mxu0 0.0
        %238 = vmatpush.msra.mxu0 0.0
        %239 = vmatpush.msra.mxu0 0.0
        %240 = vmatpush.msra.mxu0 0.0
        %241 = vmatpush.msra.mxu0 %v224
        %242 = vmatmul.f32.gmra.mxu0 %v220
        %v243 = vpop.f32.mrf.mxu0
        %v244 = vadd.f32 0.0, %v243
        %245 = vdwg.mxu0
        %246 = vst [vmem:[%s176] sm:$0xff] %v244
        %s247 = sand.u32 %s94, 1
        %s248 = scalar_lea.sflag [#allocation4], %s247
        %s249 = sand.u32 %s94, 1
        %s250 = smul.addr %s249, 8
        %s251 = scalar_lea.vmem [#allocation5], %s250
        // Predicated region
        $region37: #{tpu_custom_call.1} parent=31 // pred_check
          %p252 = pneg %p104
        $region38: #{tpu_custom_call.1} parent=31 // pred_check_branch
          %254 = sbr.rel (%p252) target = $region40
        $region39: #{tpu_custom_call.1} parent=31 // pred_region
          %256 = vsyncadd %s248, 0
          %s257 = smul.addr %s18, 8
          %s258 = scalar_lea.hbm %s3, %s257
          %s260 = sshll.u32 %s251, 4
          %s261 = int_to_ptr.vmem [resolvable:$true] %s260
          %s262 = sshll.u32 %s258, 4
          %s263 = int_to_ptr.hbm [resolvable:$true] %s262
          %265 = dma.vmem_to_hbm [thread:$0]  %s261, 128, %s263, %s248
        $region40: #{tpu_custom_call.1} parent=31 // pred_fallthru
          _
      $region32: #{tpu_custom_call.1} parent=5 // pred_fallthru
        _
      %p266 = scmp.le.s32.totalorder 2, %s13
      // Predicated region
      $region41: #{tpu_custom_call.1} parent=5 // pred_check
        %p267 = pneg %p266
      $region42: #{tpu_custom_call.1} parent=5 // pred_check_branch
        %269 = sbr.rel (%p267) target = $region44
      $region43: #{tpu_custom_call.1} parent=5 // pred_region
        %s270 = ssub.s32 %s13, 2
        // Predicated region
        $region45: #{tpu_custom_call.1} parent=43 // pred_check
          %p271 = pneg %p110
        $region46: #{tpu_custom_call.1} parent=43 // pred_check_branch
          %273 = sbr.rel (%p271) target = $region48
        $region47: #{tpu_custom_call.1} parent=43 // pred_region
          %s274 = sand.u32 %s95, 1
          %s275 = scalar_lea.sflag [#allocation4], %s274
          %s276 = sand.u32 %s95, 1
          %s277 = smul.addr %s276, 8
          %s278 = scalar_lea.vmem [#allocation5], %s277
          %280 = dma.done %s275, 128
        $region48: #{tpu_custom_call.1} parent=43 // pred_fallthru
          _
      $region44: #{tpu_custom_call.1} parent=5 // pred_fallthru
        _
    $region6: #{tpu_custom_call.1} parent=1 // loop_footer
      %s17 = sadd.s32 1, %s13
    $region7: #{tpu_custom_call.1} parent=1 // loop_footer_branch
      %12 = sbr.rel target = $region3
    $region8: #{tpu_custom_call.1} parent=1 // loop_exit
      _
    %281 = vsyncpa [#allocation3], 1
    %s282 = scalar_lea.sflag [#allocation3], 1
    %283 = vsyncpa %s282, 1
    %284 = vsyncpa [#allocation4], 1
    %s285 = scalar_lea.sflag [#allocation4], 1
    %286 = vsyncpa %s285, 1

</llo_original>
